<compile_context>
chip_gen: v6e
topology: v6e:2x2x1
jax: 0.10.0
libtpu: 0.0.40
codegen_flags: <defaults>
</compile_context>

<pallas_src>
import functools
import math

import jax
import jax.numpy as jnp
from jax.experimental import pallas as pl
from jax.experimental.pallas import tpu as pltpu


def _round_up(n, m):
    return ((n + m - 1) // m) * m


def _indep_nonlin_kernel(x_ref, w_ref, b_ref, o_ref, *, compute_dtype):
    # x_ref: (TB, L)   w_ref/b_ref: (1, L)   o_ref: (TB, L)
    x = x_ref[...].astype(compute_dtype)
    w = w_ref[...].astype(compute_dtype)      # (1, L) broadcasts along rows
    b = b_ref[...].astype(compute_dtype)
    tmp = w * (x + b)                          # VPU elementwise
    o_ref[...] = jnp.tanh(tmp).astype(o_ref.dtype)   # EUP transcendental


def _pick_row_tile(rows, bytes_per_row):
    """Row-block size: ~2 MiB, 16-sublane aligned, >= ~8 grid steps if possible."""
    tb = max(16, (2 << 20) // max(1, bytes_per_row))       # ~2 MiB blocks
    tb = min(tb, _round_up(pl.cdiv(rows, 8), 16))           # keep >= ~8 steps
    tb = max(16, (tb // 16) * 16)                           # 16-sublane aligned
    if rows <= tb:
        tb = rows                                           # full-extent block
    return tb


def _pallas_elementwise(x2, w2, b2, compute_dtype):
    """x2: (rows, L); w2/b2: (1, L). Ragged row grid, no padding/copies."""
    rows, L = x2.shape
    tb = _pick_row_tile(rows, L * x2.dtype.itemsize)
    grid = (pl.cdiv(rows, tb),)
    n = rows * L

    kernel = functools.partial(_indep_nonlin_kernel, compute_dtype=compute_dtype)
    return pl.pallas_call(
        kernel,
        out_shape=jax.ShapeDtypeStruct((rows, L), x2.dtype),
        grid_spec=pltpu.PrefetchScalarGridSpec(
            num_scalar_prefetch=0,
            grid=grid,
            in_specs=[
                pl.BlockSpec((tb, L), lambda i: (i, 0)),   # streamed x tiles
                pl.BlockSpec((1, L), lambda i: (0, 0)),    # resident weight
                pl.BlockSpec((1, L), lambda i: (0, 0)),    # resident bias
            ],
            out_specs=pl.BlockSpec((tb, L), lambda i: (i, 0)),
        ),
        compiler_params=pltpu.CompilerParams(
            dimension_semantics=("parallel",),             # rows independent
        ),
        cost_estimate=pl.CostEstimate(
            flops=2 * n,
            transcendentals=n,
            bytes_accessed=2 * n * x2.dtype.itemsize
            + L * (w2.dtype.itemsize + b2.dtype.itemsize),
        ),
    )(x2, w2, b2)


def independent_nonlinearities_forward(x, weight, bias):
    """Pallas path.  x: (..., F);  weight, bias: (F,)  ->  same shape as x."""
    F = weight.shape[0]
    orig_shape = x.shape
    x2d = x.reshape(-1, F)                 # free row-major reshape
    B = x2d.shape[0]

    # bf16 is computed natively (v6e/v7x bf16 VPU/EUP); everything else in f32.
    compute_dtype = x.dtype if x.dtype == jnp.bfloat16 else jnp.float32

    # Lane-dense fold: R rows -> one row of L = lcm(F, 128) lanes.
    R = 128 // math.gcd(F, 128)

    if R > 1 and B % R == 0:
        L = R * F
        rows = B // R
        x_fold = x2d.reshape(rows, L)                  # zero-copy layout fold
        w_fold = jnp.tile(weight, R).reshape(1, L)
        b_fold = jnp.tile(bias, R).reshape(1, L)
        out = _pallas_elementwise(x_fold, w_fold, b_fold, compute_dtype)
        return out.reshape(orig_shape)

    # F % 128 == 0 (already lane-dense) or ragged B (run unfolded: no pad /
    # slice / concat HBM copies; masked stores only, still HBM-bound).
    out = _pallas_elementwise(
        x2d, weight.reshape(1, F), bias.reshape(1, F), compute_dtype)
    return out.reshape(orig_shape)


def independent_nonlinearities(x, weight, bias, *, min_pallas_elems=64 * 1024):
    """Size-gated dispatch: tiny tensors are cheaper as a fused XLA elementwise."""
    if x.size < min_pallas_elems:
        return jnp.tanh(weight * (x + bias))
    return independent_nonlinearities_forward(x, weight, bias)


if __name__ == "__main__":
    # Module config: in_features=32, nonlin=tanh, bias=True, weight=True.
    in_features = 32
    batch = 8

    key = jax.random.PRNGKey(0)
    kx, kw, kb, kx2, kx3 = jax.random.split(key, 5)

    # init_param_: nn.init.normal_(tensor, std=1/sqrt(nelement)) for weight & bias.
    std = 1.0 / math.sqrt(in_features)
    weight = std * jax.random.normal(kw, (in_features,), dtype=jnp.float32)
    bias = std * jax.random.normal(kb, (in_features,), dtype=jnp.float32)

    # --- main demo shape (small; forces the Pallas path, folded R=4, L=128) ---
    x = jax.random.normal(kx, (batch, in_features), dtype=jnp.float32)
    out = jax.block_until_ready(independent_nonlinearities_forward(x, weight, bias))
    ref = jnp.tanh(weight * (x + bias))
    assert out.shape == (batch, in_features)
    assert jnp.allclose(out, ref, atol=1e-5, rtol=1e-5)

    # --- larger shape: multi-step pipelined ragged grid (no padding anywhere) ---
    x_big = jax.random.normal(kx2, (4104, in_features), dtype=jnp.float32)
    out_big = jax.block_until_ready(
        independent_nonlinearities_forward(x_big, weight, bias))
    ref_big = jnp.tanh(weight * (x_big + bias))
    assert out_big.shape == x_big.shape
    assert jnp.allclose(out_big, ref_big, atol=1e-5, rtol=1e-5)

    # --- F=48: gcd fold (R=8, L=384) when B % R == 0 ---
    w48 = (1.0 / math.sqrt(48)) * jax.random.normal(kw, (48,), dtype=jnp.float32)
    b48 = (1.0 / math.sqrt(48)) * jax.random.normal(kb, (48,), dtype=jnp.float32)
    x48 = jax.random.normal(kx, (16, 48), dtype=jnp.float32)
    out48 = jax.block_until_ready(
        independent_nonlinearities_forward(x48, w48, b48))
    assert jnp.allclose(out48, jnp.tanh(w48 * (x48 + b48)), atol=1e-5, rtol=1e-5)

    # --- F=48 with ragged B (B % R != 0): copy-free unfolded fallback ---
    x48r = jax.random.normal(kx3, (10, 48), dtype=jnp.float32)
    out48r = jax.block_until_ready(
        independent_nonlinearities_forward(x48r, w48, b48))
    assert jnp.allclose(out48r, jnp.tanh(w48 * (x48r + b48)), atol=1e-5, rtol=1e-5)

    # --- bf16 I/O: native bf16 compute path (halves HBM traffic for callers) ---
    x_bf = jax.random.normal(kx2, (64, in_features), dtype=jnp.float32).astype(
        jnp.bfloat16)
    out_bf = jax.block_until_ready(
        independent_nonlinearities_forward(x_bf, weight, bias))
    ref_bf = jnp.tanh(weight * (x_bf.astype(jnp.float32) + bias))
    assert out_bf.dtype == jnp.bfloat16
    assert jnp.allclose(out_bf.astype(jnp.float32), ref_bf, atol=3e-2, rtol=3e-2)

    print("KERNEL_OK")
</pallas_src>

<mosaic_0001>
module attributes {stable_mosaic.version = 11 : i64} {
  func.func @_indep_nonlin_kernel(%arg0: i32, %arg1: memref<2x128xf32, #tpu.memory_space<vmem>>, %arg2: memref<1x128xf32, #tpu.memory_space<vmem>>, %arg3: memref<1x128xf32, #tpu.memory_space<vmem>>, %arg4: memref<2x128xf32, #tpu.memory_space<vmem>>) attributes {dimension_semantics = [#tpu.dimension_semantics<parallel>], iteration_bounds = array<i64: 1>, scalar_prefetch = 0 : i64, scratch_operands = 0 : i64, tpu.core_type = #tpu.core_type<tc>, window_params = [{transform_indices = @transform_0, window_bounds = array<i64: 2, 128>}, {pipeline_mode = #tpu.pipeline_mode<synchronous>, transform_indices = @transform_1, window_bounds = array<i64: 1, 128>}, {pipeline_mode = #tpu.pipeline_mode<synchronous>, transform_indices = @transform_2, window_bounds = array<i64: 1, 128>}, {transform_indices = @transform_3, window_bounds = array<i64: 2, 128>}]} {
    %c0 = arith.constant 0 : index
    %c0_0 = arith.constant 0 : index
    %0 = vector.load %arg1[%c0, %c0_0] : memref<2x128xf32, #tpu.memory_space<vmem>>, vector<2x128xf32>
    %c0_1 = arith.constant 0 : index
    %c0_2 = arith.constant 0 : index
    %1 = vector.load %arg2[%c0_1, %c0_2] : memref<1x128xf32, #tpu.memory_space<vmem>>, vector<1x128xf32>
    %c0_3 = arith.constant 0 : index
    %c0_4 = arith.constant 0 : index
    %2 = vector.load %arg3[%c0_3, %c0_4] : memref<1x128xf32, #tpu.memory_space<vmem>>, vector<1x128xf32>
    %3 = vector.broadcast %2 : vector<1x128xf32> to vector<2x128xf32>
    %4 = arith.addf %0, %3 : vector<2x128xf32>
    %5 = vector.broadcast %1 : vector<1x128xf32> to vector<2x128xf32>
    %6 = arith.mulf %5, %4 : vector<2x128xf32>
    %7 = math.tanh %6 : vector<2x128xf32>
    %c0_5 = arith.constant 0 : index
    %c0_6 = arith.constant 0 : index
    %8 = vector.load %arg4[%c0_5, %c0_6] : memref<2x128xf32, #tpu.memory_space<vmem>>, vector<2x128xf32>
    tpu.vector_store %arg4[%c0_5, %c0_6], %7 {strides = array<i32>} : memref<2x128xf32, #tpu.memory_space<vmem>>, vector<2x128xf32>,
    return
  }
  func.func @transform_0(%arg0: i32) -> (i32, i32) {
    %c0_i32 = arith.constant 0 : i32
    %c0_i32_0 = arith.constant 0 : i32
    return %arg0, %c0_i32 : i32, i32
  }
  func.func @transform_1(%arg0: i32) -> (i32, i32) {
    %c0_i32 = arith.constant 0 : i32
    %c0_i32_0 = arith.constant 0 : i32
    %c0_i32_1 = arith.constant 0 : i32
    return %c0_i32, %c0_i32_0 : i32, i32
  }
  func.func @transform_2(%arg0: i32) -> (i32, i32) {
    %c0_i32 = arith.constant 0 : i32
    %c0_i32_0 = arith.constant 0 : i32
    %c0_i32_1 = arith.constant 0 : i32
    return %c0_i32, %c0_i32_0 : i32, i32
  }
  func.func @transform_3(%arg0: i32) -> (i32, i32) {
    %c0_i32 = arith.constant 0 : i32
    %c0_i32_0 = arith.constant 0 : i32
    return %arg0, %c0_i32 : i32, i32
  }
}

</mosaic_0001>

<llo_original>
// kernel: tpu_custom_call.1
$region0: #{tpu_custom_call.1}
  #allocation0 [shape = 'u32[]', space=smem, size = 0x4, offset = 0x4, fixed_abs, tag = 'smem constant byte address 0x4 - core index']
  #allocation1 [shape = 'u32[144,128]{1,0:T(1,128)}', space=vmem, size = 0x12000, scoped, tag = 'internal scratch']
  %s0 = inlined_call_operand.hbm [shape: f32[2,128], index: 0, kind: input, shape index: {}]
  %s1 = inlined_call_operand.vmem [shape: f32[1,128], index: 1, kind: input, shape index: {}]
  %s2 = inlined_call_operand.vmem [shape: f32[1,128], index: 2, kind: input, shape index: {}]
  %s3 = inlined_call_operand.hbm [shape: f32[2,128], index: 3, kind: output, shape index: {}]
  %s4 = sld [smem:[#allocation0]]
  $region26: #{tpu_custom_call.1} parent=0
    _
  %s6 = ssub.s32 1, %s4
  %s7 = scalar_select 0, %s6, %s4
  $region1: #{tpu_custom_call.1} parent=0
    #allocation2 [shape = 'u8[1024]{0}', space=vmem, size = 0x400, scoped, tag = 'input window, operand 0, single buffered']
    #allocation3 [shape = 's32[1]{0}', space=sflag, size = 0x4, scoped, tag = 'scoped memory for tpu_custom_call.1']
    #allocation4 [shape = 's32[1]{0}', space=sflag, size = 0x4, scoped, tag = 'scoped memory for tpu_custom_call.1']
    #allocation5 [shape = 'u8[1024]{0}', space=vmem, size = 0x400, scoped, tag = 'output window, operand 0, single buffered']
    %8 = vsyncpa [#allocation3], 0
    %9 = vsyncpa [#allocation4], 0
    // Predicated region
    $region2: #{tpu_custom_call.1} parent=1 // pred_check
      _
    $region3: #{tpu_custom_call.1} parent=1 // pred_check_branch
      %11 = sbr.rel (0) target = $region5
    $region4: #{tpu_custom_call.1} parent=1 // pred_region
      %s13 = ssub.s32 32, 32
      %14 = vsyncadd [#allocation3], %s13
      %s16 = sshll.u32 [#allocation2], 4
      %s17 = int_to_ptr.vmem [resolvable:$true] %s16
      %19 = dma.hbm_to_vmem [thread:$0]  %s0, 32, %s17, [#allocation3]
    $region5: #{tpu_custom_call.1} parent=1 // pred_fallthru
      _
    // Predicated region
    $region6: #{tpu_custom_call.1} parent=1 // pred_check
      _
    $region7: #{tpu_custom_call.1} parent=1 // pred_check_branch
      %21 = sbr.rel (0) target = $region9
    $region8: #{tpu_custom_call.1} parent=1 // pred_region
      _
    $region9: #{tpu_custom_call.1} parent=1 // pred_fallthru
      _
    // Predicated region
    $region10: #{tpu_custom_call.1} parent=1 // pred_check
      _
    $region11: #{tpu_custom_call.1} parent=1 // pred_check_branch
      %23 = sbr.rel (0) target = $region13
    $region12: #{tpu_custom_call.1} parent=1 // pred_region
      _
    $region13: #{tpu_custom_call.1} parent=1 // pred_fallthru
      _
    // Predicated region
    $region14: #{tpu_custom_call.1} parent=1 // pred_check
      _
    $region15: #{tpu_custom_call.1} parent=1 // pred_check_branch
      %25 = sbr.rel (0) target = $region17
    $region16: #{tpu_custom_call.1} parent=1 // pred_region
      %26 = dma.done [#allocation3], 32
    $region17: #{tpu_custom_call.1} parent=1 // pred_fallthru
      _
    %v27 = vld [vmem:[#allocation2] sm:$0x3]
    %v28 = vld [vmem:[%s1] sm:$0x1]
    %v29 = vld [vmem:[%s2] sm:$0x1]
    %v31 = vlaneseq
    %v32 = vshrl.u32 %v31, 7
    %v33 = vsub.s32 0, %v32
    %v34 = vrot.slane %v29, %v33
    %v36 = vadd.f32 %v27, %v34
    %v38 = vlaneseq
    %v39 = vshrl.u32 %v38, 7
    %v40 = vsub.s32 0, %v39
    %v41 = vrot.slane %v28, %v40
    %v43 = vmul.f32 %v41, %v36
    %v44 = vtanh.pop %v43
    %45 = vst [vmem:[#allocation5] sm:$0x3] %v44
    // Predicated region
    $region18: #{tpu_custom_call.1} parent=1 // pred_check
      _
    $region19: #{tpu_custom_call.1} parent=1 // pred_check_branch
      %47 = sbr.rel (0) target = $region21
    $region20: #{tpu_custom_call.1} parent=1 // pred_region
      %s49 = ssub.s32 32, 32
      %50 = vsyncadd [#allocation4], %s49
      %s52 = sshll.u32 [#allocation5], 4
      %s53 = int_to_ptr.vmem [resolvable:$true] %s52
      %55 = dma.vmem_to_hbm [thread:$0]  %s53, 32, %s3, [#allocation4]
    $region21: #{tpu_custom_call.1} parent=1 // pred_fallthru
      _
    // Predicated region
    $region22: #{tpu_custom_call.1} parent=1 // pred_check
      _
    $region23: #{tpu_custom_call.1} parent=1 // pred_check_branch
      %57 = sbr.rel (0) target = $region25
    $region24: #{tpu_custom_call.1} parent=1 // pred_region
      %58 = dma.done [#allocation4], 32
    $region25: #{tpu_custom_call.1} parent=1 // pred_fallthru
      _
    %59 = vsyncpa [#allocation3], 1
    %60 = vsyncpa [#allocation4], 1

</llo_original>
